<compile_context>
chip_gen: v5e
topology: v5e:2x2
jax: 0.10.0
libtpu: 0.0.40
codegen_flags: <defaults>
</compile_context>

<pallas_src>
import functools

import jax
import jax.numpy as jnp
from jax.experimental import pallas as pl
from jax.experimental.pallas import tpu as pltpu


def _round_up(x, n):
    return (x + n - 1) // n * n


def _cdiv(a, b):
    return (a + b - 1) // b


def _pad2d(a, rows, cols):
    pr, pc = rows - a.shape[0], cols - a.shape[1]
    if pr == 0 and pc == 0:
        return a                      # statically skip the pad when aligned
    return jnp.pad(a, ((0, pr), (0, pc)))


def _pad1d(a, n):
    p = n - a.shape[0]
    if p == 0:
        return a
    return jnp.pad(a, ((0, p),))


def _vmem_budget_bytes():
    """Physical VMEM capacity minus ~8 MiB headroom; v7x-safe 64 MiB fallback."""
    try:
        cap = int(pltpu.get_tpu_info().vmem_capacity_bytes)
    except Exception:
        cap = 64 << 20                # v7x has the smallest VMEM; be safe
    return max(cap - (8 << 20), 16 << 20)


# --------------------------------------------------------------------------
# Kernel A: resident weights (constant index_map -> weights DMA'd once).
# Grid = (token tiles,).  No accumulator, no RMW.
# --------------------------------------------------------------------------
def _mlp_kernel_resident(x_ref, w1_ref, b1_ref, w2_ref, b2_ref, o_ref, *,
                         approximate):
    h = jnp.dot(x_ref[...], w1_ref[...], preferred_element_type=jnp.float32)
    h = h + b1_ref[...]                               # f32 bias
    h = jax.nn.gelu(h, approximate=approximate)
    out = jnp.dot(h.astype(w2_ref.dtype), w2_ref[...],
                  preferred_element_type=jnp.float32)
    o_ref[...] = (out + b2_ref[...]).astype(o_ref.dtype)


# --------------------------------------------------------------------------
# Kernel B (fallback): hidden-tiled reduction with f32 VMEM accumulator.
# Grid = (token tiles, hidden tiles); hidden axis is "arbitrary".
# --------------------------------------------------------------------------
def _mlp_kernel_tiled(x_ref, w1_ref, b1_ref, w2_ref, b2_ref, o_ref, acc_ref, *,
                      approximate):
    k = pl.program_id(1)

    @pl.when(k == 0)
    def _():
        acc_ref[...] = jnp.zeros_like(acc_ref)

    h = jnp.dot(x_ref[...], w1_ref[...], preferred_element_type=jnp.float32)
    h = h + b1_ref[...]
    h = jax.nn.gelu(h, approximate=approximate)
    acc_ref[...] += jnp.dot(h.astype(w2_ref.dtype), w2_ref[...],
                            preferred_element_type=jnp.float32)

    @pl.when(k == pl.num_programs(1) - 1)
    def _():
        o_ref[...] = (acc_ref[...] + b2_ref[...]).astype(o_ref.dtype)


@functools.partial(
    jax.jit,
    static_argnames=("block_tokens", "block_hidden", "gelu_approximate",
                     "cast_to_bf16", "force_tiled"))
def mlp_pallas(x, w1, b1, w2, b2, *, block_tokens=512, block_hidden=512,
               gelu_approximate=True, cast_to_bf16=False, force_tiled=False):
    """x: (..., in_features) -> (..., out_features)."""
    orig_shape = x.shape
    out_dtype = x.dtype
    d_in = orig_shape[-1]
    d_hidden = w1.shape[1]
    d_out = w2.shape[1]

    x2d = x.reshape(-1, d_in)
    m = x2d.shape[0]

    # Compute dtype for MXU operands.  bf16 is MXU-native on v6e/v7x and
    # halves weight DMA bytes; accumulation stays f32 in both paths.
    if cast_to_bf16 and x.dtype == jnp.float32:
        compute_dtype = jnp.bfloat16
    else:
        compute_dtype = x.dtype
    c_isz = jnp.dtype(compute_dtype).itemsize
    o_isz = jnp.dtype(out_dtype).itemsize

    # ---- MXU / lane friendly padded sizes and token tile -------------------
    d_in_p = _round_up(d_in, 128)
    d_out_p = _round_up(d_out, 128)
    d_h_128 = _round_up(d_hidden, 128)

    sub = 16 if c_isz == 2 else 8                     # dtype-aware sublanes
    if m >= block_tokens:
        tm = _round_up(block_tokens, 256)             # full MXU passes
    else:
        tm = _round_up(m, sub)
    m_p = _round_up(m, tm)
    # v7x megacore: keep >= 2 token tiles when there is enough work to split.
    if m_p // tm < 2 and m > max(sub, 128):
        tm = _round_up(_cdiv(m, 2), sub)
        m_p = _round_up(m, tm)

    vmem_budget = _vmem_budget_bytes()

    # ---- path selection: resident weights vs hidden-tiled reduction --------
    def resident_bytes(tm_):
        # Conservatively count all pipelined inputs as double-buffered.
        return (2 * d_in_p * d_h_128 * c_isz            # W1
                + 2 * d_h_128 * d_out_p * c_isz         # W2
                + 2 * (d_h_128 + d_out_p) * 4           # biases (f32)
                + 2 * tm_ * d_in_p * c_isz              # x tile
                + 2 * tm_ * d_out_p * o_isz             # out tile
                + tm_ * d_h_128 * 4                     # fc1/GELU intermediate
                + tm_ * d_out_p * 4)                    # fc2 f32 result

    use_resident = False
    tm_r = tm
    if not force_tiled:
        while resident_bytes(tm_r) > vmem_budget and tm_r > sub:
            new_tm = max(sub, (tm_r // 2 // sub) * sub)
            if new_tm == tm_r:
                break
            tm_r = new_tm
        if resident_bytes(tm_r) <= vmem_budget:
            use_resident = True
            tm = tm_r
            m_p = _round_up(m, tm)

    # Zero padding is exact: padded input columns hit zero weight rows, padded
    # hidden columns have zero weights + zero bias so GELU(0) = 0 contributes
    # nothing to fc2, and padded output columns / tokens are sliced off below.

    if use_resident:
        # ---------------- resident-weight path (no reduction axis) ----------
        d_h_p = d_h_128
        x_p = _pad2d(x2d, m_p, d_in_p).astype(compute_dtype)
        w1_p = _pad2d(w1, d_in_p, d_h_p).astype(compute_dtype)
        w2_p = _pad2d(w2, d_h_p, d_out_p).astype(compute_dtype)
        b1_p = _pad1d(b1, d_h_p).astype(jnp.float32).reshape(1, d_h_p)
        b2_p = _pad1d(b2, d_out_p).astype(jnp.float32).reshape(1, d_out_p)

        grid = (m_p // tm,)
        est = resident_bytes(tm)
        vmem_limit = int(min(max(est * 5 // 4, 32 << 20), vmem_budget))

        cost = pl.CostEstimate(
            flops=2 * m_p * (d_in_p * d_h_p + d_h_p * d_out_p),
            transcendentals=m_p * d_h_p,
            bytes_accessed=int((x_p.size + w1_p.size + w2_p.size) * c_isz
                               + (b1_p.size + b2_p.size) * 4
                               + m_p * d_out_p * o_isz),
        )

        kernel = functools.partial(_mlp_kernel_resident,
                                   approximate=gelu_approximate)
        out_p = pl.pallas_call(
            kernel,
            out_shape=jax.ShapeDtypeStruct((m_p, d_out_p), out_dtype),
            grid_spec=pltpu.PrefetchScalarGridSpec(
                num_scalar_prefetch=0,
                grid=grid,
                in_specs=[
                    pl.BlockSpec((tm, d_in_p), lambda i: (i, 0)),       # x tile
                    # Constant index maps: weights/biases DMA'd once, stay
                    # VMEM-resident across all token tiles.
                    pl.BlockSpec((d_in_p, d_h_p), lambda i: (0, 0)),    # W1
                    pl.BlockSpec((1, d_h_p), lambda i: (0, 0)),         # b1
                    pl.BlockSpec((d_h_p, d_out_p), lambda i: (0, 0)),   # W2
                    pl.BlockSpec((1, d_out_p), lambda i: (0, 0)),       # b2
                ],
                out_specs=pl.BlockSpec((tm, d_out_p), lambda i: (i, 0)),
            ),
            compiler_params=pltpu.CompilerParams(
                dimension_semantics=("parallel",),
                vmem_limit_bytes=vmem_limit,
            ),
            cost_estimate=cost,
        )(x_p, w1_p, b1_p, w2_p, b2_p)
    else:
        # ---------------- hidden-tiled reduction fallback --------------------
        # TODO(synk): if profiling shows exposed weight DMA here, add
        #             pipeline_mode=pl.Buffered(3) on the W1/W2 specs, and/or
        #             hold weights in VMEM_SHARED for v7x dual-TC.
        th = _round_up(min(block_hidden, d_h_128), 128)
        d_h_p = _round_up(d_hidden, th)
        nk = d_h_p // th

        x_p = _pad2d(x2d, m_p, d_in_p).astype(compute_dtype)
        w1_p = _pad2d(w1, d_in_p, d_h_p).astype(compute_dtype)
        w2_p = _pad2d(w2, d_h_p, d_out_p).astype(compute_dtype)
        b1_p = _pad1d(b1, d_h_p).astype(jnp.float32).reshape(1, d_h_p)
        b2_p = _pad1d(b2, d_out_p).astype(jnp.float32).reshape(1, d_out_p)

        grid = (m_p // tm, nk)

        est = (2 * tm * d_in_p * c_isz            # x tile (double buffered)
               + 2 * d_in_p * th * c_isz          # W1 tile
               + 2 * th * d_out_p * c_isz         # W2 tile
               + 2 * (th + d_out_p) * 4           # biases
               + 2 * tm * d_out_p * o_isz         # output tile
               + tm * d_out_p * 4                 # f32 accumulator scratch
               + tm * th * 4)                     # fc1 intermediate
        vmem_limit = int(min(max(est * 5 // 4, 32 << 20), vmem_budget))

        n_token_tiles = m_p // tm
        cost = pl.CostEstimate(
            flops=2 * m_p * (d_in_p * d_h_p + d_h_p * d_out_p),
            transcendentals=m_p * d_h_p,
            # W1/W2 are re-streamed once per token tile in this path.
            bytes_accessed=int(x_p.size * c_isz
                               + n_token_tiles * (w1_p.size + w2_p.size) * c_isz
                               + (b1_p.size + b2_p.size) * 4
                               + m_p * d_out_p * o_isz),
        )

        kernel = functools.partial(_mlp_kernel_tiled,
                                   approximate=gelu_approximate)
        out_p = pl.pallas_call(
            kernel,
            out_shape=jax.ShapeDtypeStruct((m_p, d_out_p), out_dtype),
            grid_spec=pltpu.PrefetchScalarGridSpec(
                num_scalar_prefetch=0,
                grid=grid,
                in_specs=[
                    pl.BlockSpec((tm, d_in_p), lambda i, k: (i, 0)),    # x tile
                    pl.BlockSpec((d_in_p, th), lambda i, k: (0, k)),    # W1 tile
                    pl.BlockSpec((1, th), lambda i, k: (0, k)),         # b1 tile
                    pl.BlockSpec((th, d_out_p), lambda i, k: (k, 0)),   # W2 tile
                    pl.BlockSpec((1, d_out_p), lambda i, k: (0, 0)),    # b2
                ],
                out_specs=pl.BlockSpec((tm, d_out_p), lambda i, k: (i, 0)),
                scratch_shapes=[pltpu.VMEM((tm, d_out_p), jnp.float32)],
            ),
            compiler_params=pltpu.CompilerParams(
                dimension_semantics=("parallel", "arbitrary"),
                vmem_limit_bytes=vmem_limit,
            ),
            cost_estimate=cost,
        )(x_p, w1_p, b1_p, w2_p, b2_p)

    out = out_p[:m, :d_out]
    return out.reshape(*orig_shape[:-1], d_out)


def init_mlp_params(key, in_features, hidden_features=None, out_features=None,
                    dtype=jnp.float32):
    """Deterministic synthetic params; shapes match nn.Linear layers in Mlp."""
    out_features = out_features or in_features
    hidden_features = hidden_features or in_features
    k1, k2, k3, k4 = jax.random.split(key, 4)
    # Stored as (in, out); PyTorch keeps (out, in) and does x @ W.T — same math.
    scale1 = 1.0 / jnp.sqrt(in_features)
    scale2 = 1.0 / jnp.sqrt(hidden_features)
    w1 = jax.random.uniform(k1, (in_features, hidden_features), dtype,
                            -scale1, scale1)
    b1 = jax.random.uniform(k2, (hidden_features,), dtype, -scale1, scale1)
    w2 = jax.random.uniform(k3, (hidden_features, out_features), dtype,
                            -scale2, scale2)
    b2 = jax.random.uniform(k4, (out_features,), dtype, -scale2, scale2)
    return w1, b1, w2, b2


if __name__ == "__main__":
    key = jax.random.PRNGKey(0)
    kx, kp, kp2 = jax.random.split(key, 3)

    # Small shapes consistent with the module: (batch, seq, in_features)
    batch, seq, in_features, hidden_features = 2, 8, 32, 64
    x = jax.random.normal(kx, (batch, seq, in_features), dtype=jnp.float32)
    w1, b1, w2, b2 = init_mlp_params(kp, in_features, hidden_features)

    # 1) Default path: resident weights, f32 operands, tanh-approx GELU.
    y = mlp_pallas(x, w1, b1, w2, b2)
    jax.block_until_ready(y)
    ref = jax.nn.gelu(x @ w1 + b1, approximate=True) @ w2 + b2
    assert y.shape == (batch, seq, in_features)     # out_features defaults to in
    assert jnp.allclose(y, ref, atol=1e-5, rtol=1e-5)

    # 2) Exact erf GELU (nn.GELU() default semantics) still supported.
    y_erf = mlp_pallas(x, w1, b1, w2, b2, gelu_approximate=False)
    ref_erf = jax.nn.gelu(x @ w1 + b1, approximate=False) @ w2 + b2
    assert jnp.allclose(y_erf, ref_erf, atol=1e-5, rtol=1e-5)

    # 3) bf16 MXU operands (v6e/v7x native), f32 accumulation — mixed-precision
    #    tolerance vs the f32 reference.
    y_bf16 = mlp_pallas(x, w1, b1, w2, b2, cast_to_bf16=True)
    assert jnp.allclose(y_bf16, ref, atol=5e-2, rtol=5e-2)

    # 4) Hidden-tiled reduction fallback (forced) with a wider hidden dim.
    hidden_big = 256
    w1b, b1b, w2b, b2b = init_mlp_params(kp2, in_features, hidden_big)
    y_t = mlp_pallas(x, w1b, b1b, w2b, b2b, block_hidden=128, force_tiled=True)
    ref_t = jax.nn.gelu(x @ w1b + b1b, approximate=True) @ w2b + b2b
    assert jnp.allclose(y_t, ref_t, atol=1e-5, rtol=1e-5)

    print("KERNEL_OK")
</pallas_src>

<mosaic_0001>
module attributes {stable_mosaic.version = 11 : i64} {
  func.func @_mlp_kernel_resident(%arg0: i32, %arg1: memref<16x128xf32, #tpu.memory_space<vmem>>, %arg2: memref<128x128xf32, #tpu.memory_space<vmem>>, %arg3: memref<1x128xf32, #tpu.memory_space<vmem>>, %arg4: memref<128x128xf32, #tpu.memory_space<vmem>>, %arg5: memref<1x128xf32, #tpu.memory_space<vmem>>, %arg6: memref<16x128xf32, #tpu.memory_space<vmem>>) attributes {dimension_semantics = [#tpu.dimension_semantics<parallel>], iteration_bounds = array<i64: 1>, scalar_prefetch = 0 : i64, scratch_operands = 0 : i64, tpu.core_type = #tpu.core_type<tc>, window_params = [{transform_indices = @transform_0, window_bounds = array<i64: 16, 128>}, {pipeline_mode = #tpu.pipeline_mode<synchronous>, transform_indices = @transform_1, window_bounds = array<i64: 128, 128>}, {pipeline_mode = #tpu.pipeline_mode<synchronous>, transform_indices = @transform_2, window_bounds = array<i64: 1, 128>}, {pipeline_mode = #tpu.pipeline_mode<synchronous>, transform_indices = @transform_3, window_bounds = array<i64: 128, 128>}, {pipeline_mode = #tpu.pipeline_mode<synchronous>, transform_indices = @transform_4, window_bounds = array<i64: 1, 128>}, {transform_indices = @transform_5, window_bounds = array<i64: 16, 128>}]} {
    %c0 = arith.constant 0 : index
    %c0_0 = arith.constant 0 : index
    %0 = vector.load %arg1[%c0, %c0_0] : memref<16x128xf32, #tpu.memory_space<vmem>>, vector<16x128xf32>
    %c0_1 = arith.constant 0 : index
    %c0_2 = arith.constant 0 : index
    %1 = vector.load %arg2[%c0_1, %c0_2] : memref<128x128xf32, #tpu.memory_space<vmem>>, vector<128x128xf32>
    %cst = arith.constant dense<0.000000e+00> : vector<16x128xf32>
    %2 = tpu.matmul %0, %1, %cst {dimension_numbers = #tpu.dot_dimension_numbers<[1], [0], [0], [1], [0, 0, 1, 1], [], []>} : vector<16x128xf32>, vector<128x128xf32>, vector<16x128xf32> -> vector<16x128xf32>
    %c0_3 = arith.constant 0 : index
    %c0_4 = arith.constant 0 : index
    %3 = vector.load %arg3[%c0_3, %c0_4] : memref<1x128xf32, #tpu.memory_space<vmem>>, vector<1x128xf32>
    %4 = vector.broadcast %3 : vector<1x128xf32> to vector<16x128xf32>
    %5 = arith.addf %2, %4 : vector<16x128xf32>
    %6 = arith.mulf %5, %5 : vector<16x128xf32>
    %7 = arith.mulf %5, %6 : vector<16x128xf32>
    %cst_5 = arith.constant 4.471500e-02 : f32
    %8 = vector.broadcast %cst_5 : f32 to vector<16x128xf32>
    %9 = arith.mulf %8, %7 : vector<16x128xf32>
    %10 = arith.addf %5, %9 : vector<16x128xf32>
    %cst_6 = arith.constant 0.797884583 : f32
    %11 = vector.broadcast %cst_6 : f32 to vector<16x128xf32>
    %12 = arith.mulf %11, %10 : vector<16x128xf32>
    %13 = math.tanh %12 : vector<16x128xf32>
    %cst_7 = arith.constant 1.000000e+00 : f32
    %14 = vector.broadcast %cst_7 : f32 to vector<16x128xf32>
    %15 = arith.addf %14, %13 : vector<16x128xf32>
    %cst_8 = arith.constant 5.000000e-01 : f32
    %16 = vector.broadcast %cst_8 : f32 to vector<16x128xf32>
    %17 = arith.mulf %16, %15 : vector<16x128xf32>
    %18 = arith.mulf %5, %17 : vector<16x128xf32>
    %c0_9 = arith.constant 0 : index
    %c0_10 = arith.constant 0 : index
    %19 = vector.load %arg4[%c0_9, %c0_10] : memref<128x128xf32, #tpu.memory_space<vmem>>, vector<128x128xf32>
    %cst_11 = arith.constant dense<0.000000e+00> : vector<16x128xf32>
    %20 = tpu.matmul %18, %19, %cst_11 {dimension_numbers = #tpu.dot_dimension_numbers<[1], [0], [0], [1], [0, 0, 1, 1], [], []>} : vector<16x128xf32>, vector<128x128xf32>, vector<16x128xf32> -> vector<16x128xf32>
    %c0_12 = arith.constant 0 : index
    %c0_13 = arith.constant 0 : index
    %21 = vector.load %arg5[%c0_12, %c0_13] : memref<1x128xf32, #tpu.memory_space<vmem>>, vector<1x128xf32>
    %22 = vector.broadcast %21 : vector<1x128xf32> to vector<16x128xf32>
    %23 = arith.addf %20, %22 : vector<16x128xf32>
    %c0_14 = arith.constant 0 : index
    %c0_15 = arith.constant 0 : index
    %24 = vector.load %arg6[%c0_14, %c0_15] : memref<16x128xf32, #tpu.memory_space<vmem>>, vector<16x128xf32>
    tpu.vector_store %arg6[%c0_14, %c0_15], %23 {strides = array<i32>} : memref<16x128xf32, #tpu.memory_space<vmem>>, vector<16x128xf32>,
    return
  }
  func.func @transform_0(%arg0: i32) -> (i32, i32) {
    %c0_i32 = arith.constant 0 : i32
    %c0_i32_0 = arith.constant 0 : i32
    return %arg0, %c0_i32 : i32, i32
  }
  func.func @transform_1(%arg0: i32) -> (i32, i32) {
    %c0_i32 = arith.constant 0 : i32
    %c0_i32_0 = arith.constant 0 : i32
    %c0_i32_1 = arith.constant 0 : i32
    return %c0_i32, %c0_i32_0 : i32, i32
  }
  func.func @transform_2(%arg0: i32) -> (i32, i32) {
    %c0_i32 = arith.constant 0 : i32
    %c0_i32_0 = arith.constant 0 : i32
    %c0_i32_1 = arith.constant 0 : i32
    return %c0_i32, %c0_i32_0 : i32, i32
  }
  func.func @transform_3(%arg0: i32) -> (i32, i32) {
    %c0_i32 = arith.constant 0 : i32
    %c0_i32_0 = arith.constant 0 : i32
    %c0_i32_1 = arith.constant 0 : i32
    return %c0_i32, %c0_i32_0 : i32, i32
  }
  func.func @transform_4(%arg0: i32) -> (i32, i32) {
    %c0_i32 = arith.constant 0 : i32
    %c0_i32_0 = arith.constant 0 : i32
    %c0_i32_1 = arith.constant 0 : i32
    return %c0_i32, %c0_i32_0 : i32, i32
  }
  func.func @transform_5(%arg0: i32) -> (i32, i32) {
    %c0_i32 = arith.constant 0 : i32
    %c0_i32_0 = arith.constant 0 : i32
    return %arg0, %c0_i32 : i32, i32
  }
}

</mosaic_0001>

<llo_original>
// kernel: mlp_pallas.1
$region0: #{mlp_pallas.1}
  #allocation0 [shape = 'u32[]', space=smem, size = 0x4, offset = 0x4, fixed_abs, tag = 'smem constant byte address 0x4 - core index']
  #allocation1 [shape = 'u32[72,128]{1,0:T(1,128)}', space=vmem, size = 0x9000, scoped, tag = 'internal scratch']
  %s0 = inlined_call_operand.vmem [shape: f32[16,128], index: 0, kind: input, shape index: {}]
  %s1 = inlined_call_operand.vmem [shape: f32[128,128], index: 1, kind: input, shape index: {}]
  %s2 = inlined_call_operand.vmem [shape: f32[1,128], index: 2, kind: input, shape index: {}]
  %s3 = inlined_call_operand.vmem [shape: f32[128,128], index: 3, kind: input, shape index: {}]
  %s4 = inlined_call_operand.vmem [shape: f32[1,128], index: 4, kind: input, shape index: {}]
  %s5 = inlined_call_operand.vmem [shape: f32[16,128], index: 5, kind: output, shape index: {}]
  %s6 = sld [smem:[#allocation0]]
  $region30: #{mlp_pallas.1} parent=0
    _
  %s8 = ssub.s32 1, %s6
  %s9 = scalar_select 0, %s8, %s6
  // Predicated region
  $region2: #{mlp_pallas.1} parent=0 // pred_check
    _
  $region3: #{mlp_pallas.1} parent=0 // pred_check_branch
    %11 = sbr.rel (0) target = $region5
  $region4: #{mlp_pallas.1} parent=0 // pred_region
    _
  $region5: #{mlp_pallas.1} parent=0 // pred_fallthru
    _
  // Predicated region
  $region6: #{mlp_pallas.1} parent=0 // pred_check
    _
  $region7: #{mlp_pallas.1} parent=0 // pred_check_branch
    %13 = sbr.rel (0) target = $region9
  $region8: #{mlp_pallas.1} parent=0 // pred_region
    _
  $region9: #{mlp_pallas.1} parent=0 // pred_fallthru
    _
  // Predicated region
  $region10: #{mlp_pallas.1} parent=0 // pred_check
    _
  $region11: #{mlp_pallas.1} parent=0 // pred_check_branch
    %15 = sbr.rel (0) target = $region13
  $region12: #{mlp_pallas.1} parent=0 // pred_region
    _
  $region13: #{mlp_pallas.1} parent=0 // pred_fallthru
    _
  // Predicated region
  $region14: #{mlp_pallas.1} parent=0 // pred_check
    _
  $region15: #{mlp_pallas.1} parent=0 // pred_check_branch
    %17 = sbr.rel (0) target = $region17
  $region16: #{mlp_pallas.1} parent=0 // pred_region
    _
  $region17: #{mlp_pallas.1} parent=0 // pred_fallthru
    _
  // Predicated region
  $region18: #{mlp_pallas.1} parent=0 // pred_check
    _
  $region19: #{mlp_pallas.1} parent=0 // pred_check_branch
    %19 = sbr.rel (0) target = $region21
  $region20: #{mlp_pallas.1} parent=0 // pred_region
    _
  $region21: #{mlp_pallas.1} parent=0 // pred_fallthru
    _
  %v20 = vld [vmem:[%s0] sm:$0xff]
  %v21 = vld [vmem:[%s0 + $0x8] sm:$0xff]
  %v22 = vld [vmem:[%s1] sm:$0xff]
  %v23 = vld [vmem:[%s1 + $0x8] sm:$0xff]
  %v24 = vld [vmem:[%s1 + $0x10] sm:$0xff]
  %v25 = vld [vmem:[%s1 + $0x18] sm:$0xff]
  %v26 = vld [vmem:[%s1 + $0x20] sm:$0xff]
  %v27 = vld [vmem:[%s1 + $0x28] sm:$0xff]
  %v28 = vld [vmem:[%s1 + $0x30] sm:$0xff]
  %v29 = vld [vmem:[%s1 + $0x38] sm:$0xff]
  %v30 = vld [vmem:[%s1 + $0x40] sm:$0xff]
  %v31 = vld [vmem:[%s1 + $0x48] sm:$0xff]
  %v32 = vld [vmem:[%s1 + $0x50] sm:$0xff]
  %v33 = vld [vmem:[%s1 + $0x58] sm:$0xff]
  %v34 = vld [vmem:[%s1 + $0x60] sm:$0xff]
  %v35 = vld [vmem:[%s1 + $0x68] sm:$0xff]
  %v36 = vld [vmem:[%s1 + $0x70] sm:$0xff]
  %v37 = vld [vmem:[%s1 + $0x78] sm:$0xff]
  %v38 = vld [vmem:[%s2] sm:$0x1]
  %v40 = vperm.slane %v38, 0
  %42 = vmatpush.msra.mxu0 %v37
  %43 = vmatpush.msra.mxu0 %v36
  %44 = vmatpush.msra.mxu0 %v35
  %45 = vmatpush.msra.mxu0 %v34
  %46 = vmatpush.msra.mxu0 %v33
  %47 = vmatpush.msra.mxu0 %v32
  %48 = vmatpush.msra.mxu0 %v31
  %49 = vmatpush.msra.mxu0 %v30
  %50 = vmatpush.msra.mxu0 %v29
  %51 = vmatpush.msra.mxu0 %v28
  %52 = vmatpush.msra.mxu0 %v27
  %53 = vmatpush.msra.mxu0 %v26
  %54 = vmatpush.msra.mxu0 %v25
  %55 = vmatpush.msra.mxu0 %v24
  %56 = vmatpush.msra.mxu0 %v23
  %57 = vmatpush.msra.mxu0 %v22
  %58 = vmatmul.f32.gmra.mxu0 %v20
  %v59 = vpop.f32.mrf.mxu0
  %v60 = vadd.f32 %v40, %v59
  %61 = vmatmul.f32.gmra.mxu0 %v21
  %v62 = vpop.f32.mrf.mxu0
  %v63 = vadd.f32 %v40, %v62
  %64 = vdwg.mxu0
  %v65 = vmul.f32 %v60, %v60
  %v66 = vmul.f32 %v63, %v63
  %v67 = vmul.f32 %v60, %v65
  %v68 = vmul.f32 %v63, %v66
  %v69 = vmul.f32 %v67, 0.044715
  %v70 = vmul.f32 %v68, 0.044715
  %v71 = vadd.f32 %v60, %v69
  %v72 = vadd.f32 %v63, %v70
  %v73 = vmul.f32 %v71, 0.7978846
  %v74 = vmul.f32 %v72, 0.7978846
  %v75 = vtanh.pop %v73
  %v76 = vtanh.pop %v74
  %v77 = vadd.f32 %v75, 1.0
  %v78 = vadd.f32 %v76, 1.0
  %v79 = vmul.f32 %v77, 0.5
  %v80 = vmul.f32 %v78, 0.5
  %v81 = vmul.f32 %v60, %v79
  %v82 = vmul.f32 %v63, %v80
  %v83 = vld [vmem:[%s3] sm:$0xff]
  %v84 = vld [vmem:[%s3 + $0x8] sm:$0xff]
  %v85 = vld [vmem:[%s3 + $0x10] sm:$0xff]
  %v86 = vld [vmem:[%s3 + $0x18] sm:$0xff]
  %v87 = vld [vmem:[%s3 + $0x20] sm:$0xff]
  %v88 = vld [vmem:[%s3 + $0x28] sm:$0xff]
  %v89 = vld [vmem:[%s3 + $0x30] sm:$0xff]
  %v90 = vld [vmem:[%s3 + $0x38] sm:$0xff]
  %v91 = vld [vmem:[%s3 + $0x40] sm:$0xff]
  %v92 = vld [vmem:[%s3 + $0x48] sm:$0xff]
  %v93 = vld [vmem:[%s3 + $0x50] sm:$0xff]
  %v94 = vld [vmem:[%s3 + $0x58] sm:$0xff]
  %v95 = vld [vmem:[%s3 + $0x60] sm:$0xff]
  %v96 = vld [vmem:[%s3 + $0x68] sm:$0xff]
  %v97 = vld [vmem:[%s3 + $0x70] sm:$0xff]
  %v98 = vld [vmem:[%s3 + $0x78] sm:$0xff]
  %v99 = vld [vmem:[%s4] sm:$0x1]
  %v101 = vperm.slane %v99, 0
  %103 = vmatpush.msra.mxu0 %v98
  %104 = vmatpush.msra.mxu0 %v97
  %105 = vmatpush.msra.mxu0 %v96
  %106 = vmatpush.msra.mxu0 %v95
  %107 = vmatpush.msra.mxu0 %v94
  %108 = vmatpush.msra.mxu0 %v93
  %109 = vmatpush.msra.mxu0 %v92
  %110 = vmatpush.msra.mxu0 %v91
  %111 = vmatpush.msra.mxu0 %v90
  %112 = vmatpush.msra.mxu0 %v89
  %113 = vmatpush.msra.mxu0 %v88
  %114 = vmatpush.msra.mxu0 %v87
  %115 = vmatpush.msra.mxu0 %v86
  %116 = vmatpush.msra.mxu0 %v85
  %117 = vmatpush.msra.mxu0 %v84
  %118 = vmatpush.msra.mxu0 %v83
  %119 = vmatmul.f32.gmra.mxu0 %v81
  %v120 = vpop.f32.mrf.mxu0
  %v121 = vadd.f32 %v101, %v120
  %122 = vmatmul.f32.gmra.mxu0 %v82
  %v123 = vpop.f32.mrf.mxu0
  %v124 = vadd.f32 %v101, %v123
  %125 = vdwg.mxu0
  %126 = vst [vmem:[%s5] sm:$0xff] %v121
  %127 = vst [vmem:[%s5 + $0x8] sm:$0xff] %v124
  // Predicated region
  $region22: #{mlp_pallas.1} parent=0 // pred_check
    _
  $region23: #{mlp_pallas.1} parent=0 // pred_check_branch
    %129 = sbr.rel (0) target = $region25
  $region24: #{mlp_pallas.1} parent=0 // pred_region
    _
  $region25: #{mlp_pallas.1} parent=0 // pred_fallthru
    _
  // Predicated region
  $region26: #{mlp_pallas.1} parent=0 // pred_check
    _
  $region27: #{mlp_pallas.1} parent=0 // pred_check_branch
    %131 = sbr.rel (0) target = $region29
  $region28: #{mlp_pallas.1} parent=0 // pred_region
    _
  $region29: #{mlp_pallas.1} parent=0 // pred_fallthru
    _

</llo_original>
